<compile_context>
chip_gen: v7x
topology: tpu7x:2x2x1
jax: 0.10.0
libtpu: 0.0.40
codegen_flags: <defaults>
</compile_context>

<pallas_src>
import functools

import jax
import jax.numpy as jnp
from jax.experimental import pallas as pl
from jax.experimental.pallas import tpu as pltpu

LANE = 128      # TPU lane width (last-dim tiling)
SUBLANE = 16    # row tile granularity safe for both f32 (8) and bf16 (16)

H1, H2, H3 = 256, 128, 64   # hidden widths from the PyTorch module


def _round_up(n, m):
    return ((n + m - 1) // m) * m


def ann_kernel(x_ref, w1_ref, b1_ref, w2_ref, b2_ref,
               w3_ref, b3_ref, w4_ref, b4_ref, o_ref):
    """Fused 4-layer MLP: three matmul+bias+ReLU stages + final matmul+bias.

    Matmuls accumulate in f32 on the MXU (preferred_element_type); activations
    are cast back to the weight dtype (bf16 or f32) so every layer's matmul
    runs with MXU-native operands.
    """
    x = x_ref[...]

    h1 = jnp.dot(x, w1_ref[...], preferred_element_type=jnp.float32) + b1_ref[...]
    h1 = jnp.maximum(h1, 0.0).astype(w2_ref.dtype)
    # TODO(synk): dropout(p=0.3) skipped (inference / eval() semantics)

    h2 = jnp.dot(h1, w2_ref[...], preferred_element_type=jnp.float32) + b2_ref[...]
    h2 = jnp.maximum(h2, 0.0).astype(w3_ref.dtype)
    # TODO(synk): dropout(p=0.2) skipped (inference / eval() semantics)

    h3 = jnp.dot(h2, w3_ref[...], preferred_element_type=jnp.float32) + b3_ref[...]
    h3 = jnp.maximum(h3, 0.0).astype(w4_ref.dtype)
    # TODO(synk): dropout(p=0.1) skipped (inference / eval() semantics)

    logits = jnp.dot(h3, w4_ref[...], preferred_element_type=jnp.float32) + b4_ref[...]
    o_ref[...] = logits.astype(o_ref.dtype)


def _pad2d(a, rows, cols):
    r, c = a.shape
    return jnp.pad(a, ((0, rows - r), (0, cols - c)))


@functools.partial(jax.jit, static_argnames=("block_b", "use_bf16"))
def lightweight_ann_forward(x, params, block_b=512, use_bf16=False):
    """x: (B, input_size) f32.  params: w1..w4 as (in, out), b1..b4 as (1, out)."""
    B, input_size = x.shape
    num_classes = params["w4"].shape[1]

    # ---- Lane/feature padding: every matmul dim becomes a multiple of 128 ----
    in_p = _round_up(input_size, LANE)    # layer-1 contraction dim
    h3_p = _round_up(H3, LANE)            # 64 -> 128 (no half-empty vregs)
    out_p = _round_up(num_classes, LANE)  # lane-dense output -> unmasked stores

    w1 = _pad2d(params["w1"], in_p, H1)
    b1 = params["b1"]
    w2 = params["w2"]
    b2 = params["b2"]
    w3 = _pad2d(params["w3"], H2, h3_p)
    b3 = _pad2d(params["b3"], 1, h3_p)
    w4 = _pad2d(params["w4"], h3_p, out_p)
    b4 = _pad2d(params["b4"], 1, out_p)

    xp = jnp.pad(x, ((0, 0), (0, in_p - input_size)))

    # ---- Batch tiling: big M tile; pad B so any batch size works -------------
    bb = min(_round_up(block_b, SUBLANE), _round_up(B, SUBLANE))
    Bp = _round_up(B, bb)
    if Bp != B:
        xp = jnp.pad(xp, ((0, Bp - B), (0, 0)))

    # ---- Optional bf16 matmul operands (f32 accumulation inside kernel) ------
    cdt = jnp.bfloat16 if use_bf16 else xp.dtype
    xp = xp.astype(cdt)
    w1, w2, w3, w4 = (w.astype(cdt) for w in (w1, w2, w3, w4))

    def const_spec(shape):
        # Constant block index -> weights stay resident, no per-step re-DMA.
        return pl.BlockSpec(shape, lambda i: (0, 0))

    grid = (Bp // bb,)
    out_padded = pl.pallas_call(
        ann_kernel,
        out_shape=jax.ShapeDtypeStruct((Bp, out_p), jnp.float32),
        grid_spec=pltpu.PrefetchScalarGridSpec(
            num_scalar_prefetch=0,
            grid=grid,
            in_specs=[
                pl.BlockSpec((bb, in_p), lambda i: (i, 0)),   # x batch tile
                const_spec(w1.shape), const_spec(b1.shape),
                const_spec(w2.shape), const_spec(b2.shape),
                const_spec(w3.shape), const_spec(b3.shape),
                const_spec(w4.shape), const_spec(b4.shape),
            ],
            out_specs=pl.BlockSpec((bb, out_p), lambda i: (i, 0)),
        ),
        compiler_params=pltpu.CompilerParams(
            dimension_semantics=("parallel",),   # megacore / v7x 2-TC sharding
        ),
    )(xp, w1, b1, w2, b2, w3, b3, w4, b4)

    return out_padded[:B, :num_classes]


def init_params(key, input_size, num_classes):
    """Deterministic init mirroring nn.Linear default U(-1/sqrt(fan_in), +).
    Weights are stored transposed: (in_features, out_features)."""
    dims = [(input_size, H1), (H1, H2), (H2, H3), (H3, num_classes)]
    params = {}
    for idx, (fan_in, fan_out) in enumerate(dims, start=1):
        key, kw, kb = jax.random.split(key, 3)
        bound = 1.0 / jnp.sqrt(fan_in)
        params[f"w{idx}"] = jax.random.uniform(
            kw, (fan_in, fan_out), jnp.float32, -bound, bound)
        params[f"b{idx}"] = jax.random.uniform(
            kb, (1, fan_out), jnp.float32, -bound, bound)
    return params


def reference_forward(x, params):
    h = x
    for idx in range(1, 4):
        h = jnp.maximum(h @ params[f"w{idx}"] + params[f"b{idx}"], 0.0)
    return h @ params["w4"] + params["b4"]


if __name__ == "__main__":
    key = jax.random.PRNGKey(0)
    k_param, k_x1, k_x2 = jax.random.split(key, 3)

    input_size, num_classes = 32, 8
    params = init_params(k_param, input_size, num_classes)

    # --- f32 path, default (large) batch tile, single grid step ------------
    batch = 48
    x = jax.random.normal(k_x1, (batch, input_size), jnp.float32)
    out = jax.block_until_ready(lightweight_ann_forward(x, params))
    ref = reference_forward(x, params)
    assert out.shape == (batch, num_classes)
    assert jnp.allclose(out, ref, atol=1e-4, rtol=1e-4), "f32 mismatch vs reference"

    # --- bf16 operands, small tile -> multi-step grid + batch padding ------
    batch2 = 40
    x2 = jax.random.normal(k_x2, (batch2, input_size), jnp.float32)
    out2 = jax.block_until_ready(
        lightweight_ann_forward(x2, params, block_b=16, use_bf16=True))
    ref2 = reference_forward(x2, params)
    assert out2.shape == (batch2, num_classes)
    assert jnp.allclose(out2, ref2, atol=5e-2, rtol=5e-2), "bf16 mismatch vs reference"

    print("KERNEL_OK")
</pallas_src>

<mosaic_0001>
module attributes {stable_mosaic.version = 11 : i64} {
  func.func @ann_kernel(%arg0: i32, %arg1: memref<48x128xf32, #tpu.memory_space<vmem>>, %arg2: memref<128x256xf32, #tpu.memory_space<vmem>>, %arg3: memref<1x256xf32, #tpu.memory_space<vmem>>, %arg4: memref<256x128xf32, #tpu.memory_space<vmem>>, %arg5: memref<1x128xf32, #tpu.memory_space<vmem>>, %arg6: memref<128x128xf32, #tpu.memory_space<vmem>>, %arg7: memref<1x128xf32, #tpu.memory_space<vmem>>, %arg8: memref<128x128xf32, #tpu.memory_space<vmem>>, %arg9: memref<1x128xf32, #tpu.memory_space<vmem>>, %arg10: memref<48x128xf32, #tpu.memory_space<vmem>>) attributes {dimension_semantics = [#tpu.dimension_semantics<parallel>], iteration_bounds = array<i64: 1>, scalar_prefetch = 0 : i64, scratch_operands = 0 : i64, tpu.core_type = #tpu.core_type<tc>, window_params = [{transform_indices = @transform_0, window_bounds = array<i64: 48, 128>}, {pipeline_mode = #tpu.pipeline_mode<synchronous>, transform_indices = @transform_1, window_bounds = array<i64: 128, 256>}, {pipeline_mode = #tpu.pipeline_mode<synchronous>, transform_indices = @transform_2, window_bounds = array<i64: 1, 256>}, {pipeline_mode = #tpu.pipeline_mode<synchronous>, transform_indices = @transform_3, window_bounds = array<i64: 256, 128>}, {pipeline_mode = #tpu.pipeline_mode<synchronous>, transform_indices = @transform_4, window_bounds = array<i64: 1, 128>}, {pipeline_mode = #tpu.pipeline_mode<synchronous>, transform_indices = @transform_5, window_bounds = array<i64: 128, 128>}, {pipeline_mode = #tpu.pipeline_mode<synchronous>, transform_indices = @transform_6, window_bounds = array<i64: 1, 128>}, {pipeline_mode = #tpu.pipeline_mode<synchronous>, transform_indices = @transform_7, window_bounds = array<i64: 128, 128>}, {pipeline_mode = #tpu.pipeline_mode<synchronous>, transform_indices = @transform_8, window_bounds = array<i64: 1, 128>}, {transform_indices = @transform_9, window_bounds = array<i64: 48, 128>}]} {
    %c0 = arith.constant 0 : index
    %c0_0 = arith.constant 0 : index
    %0 = vector.load %arg1[%c0, %c0_0] : memref<48x128xf32, #tpu.memory_space<vmem>>, vector<48x128xf32>
    %c0_1 = arith.constant 0 : index
    %c0_2 = arith.constant 0 : index
    %1 = vector.load %arg2[%c0_1, %c0_2] : memref<128x256xf32, #tpu.memory_space<vmem>>, vector<128x256xf32>
    %cst = arith.constant dense<0.000000e+00> : vector<48x256xf32>
    %2 = tpu.matmul %0, %1, %cst {dimension_numbers = #tpu.dot_dimension_numbers<[1], [0], [0], [1], [0, 0, 1, 1], [], []>} : vector<48x128xf32>, vector<128x256xf32>, vector<48x256xf32> -> vector<48x256xf32>
    %c0_3 = arith.constant 0 : index
    %c0_4 = arith.constant 0 : index
    %3 = vector.load %arg3[%c0_3, %c0_4] : memref<1x256xf32, #tpu.memory_space<vmem>>, vector<1x256xf32>
    %4 = vector.broadcast %3 : vector<1x256xf32> to vector<48x256xf32>
    %5 = arith.addf %2, %4 : vector<48x256xf32>
    %cst_5 = arith.constant 0.000000e+00 : f32
    %6 = vector.broadcast %cst_5 : f32 to vector<48x256xf32>
    %7 = arith.maximumf %5, %6 : vector<48x256xf32>
    %c0_6 = arith.constant 0 : index
    %c0_7 = arith.constant 0 : index
    %8 = vector.load %arg4[%c0_6, %c0_7] : memref<256x128xf32, #tpu.memory_space<vmem>>, vector<256x128xf32>
    %cst_8 = arith.constant dense<0.000000e+00> : vector<48x128xf32>
    %9 = tpu.matmul %7, %8, %cst_8 {dimension_numbers = #tpu.dot_dimension_numbers<[1], [0], [0], [1], [0, 0, 1, 1], [], []>} : vector<48x256xf32>, vector<256x128xf32>, vector<48x128xf32> -> vector<48x128xf32>
    %c0_9 = arith.constant 0 : index
    %c0_10 = arith.constant 0 : index
    %10 = vector.load %arg5[%c0_9, %c0_10] : memref<1x128xf32, #tpu.memory_space<vmem>>, vector<1x128xf32>
    %11 = vector.broadcast %10 : vector<1x128xf32> to vector<48x128xf32>
    %12 = arith.addf %9, %11 : vector<48x128xf32>
    %cst_11 = arith.constant 0.000000e+00 : f32
    %13 = vector.broadcast %cst_11 : f32 to vector<48x128xf32>
    %14 = arith.maximumf %12, %13 : vector<48x128xf32>
    %c0_12 = arith.constant 0 : index
    %c0_13 = arith.constant 0 : index
    %15 = vector.load %arg6[%c0_12, %c0_13] : memref<128x128xf32, #tpu.memory_space<vmem>>, vector<128x128xf32>
    %cst_14 = arith.constant dense<0.000000e+00> : vector<48x128xf32>
    %16 = tpu.matmul %14, %15, %cst_14 {dimension_numbers = #tpu.dot_dimension_numbers<[1], [0], [0], [1], [0, 0, 1, 1], [], []>} : vector<48x128xf32>, vector<128x128xf32>, vector<48x128xf32> -> vector<48x128xf32>
    %c0_15 = arith.constant 0 : index
    %c0_16 = arith.constant 0 : index
    %17 = vector.load %arg7[%c0_15, %c0_16] : memref<1x128xf32, #tpu.memory_space<vmem>>, vector<1x128xf32>
    %18 = vector.broadcast %17 : vector<1x128xf32> to vector<48x128xf32>
    %19 = arith.addf %16, %18 : vector<48x128xf32>
    %cst_17 = arith.constant 0.000000e+00 : f32
    %20 = vector.broadcast %cst_17 : f32 to vector<48x128xf32>
    %21 = arith.maximumf %19, %20 : vector<48x128xf32>
    %c0_18 = arith.constant 0 : index
    %c0_19 = arith.constant 0 : index
    %22 = vector.load %arg8[%c0_18, %c0_19] : memref<128x128xf32, #tpu.memory_space<vmem>>, vector<128x128xf32>
    %cst_20 = arith.constant dense<0.000000e+00> : vector<48x128xf32>
    %23 = tpu.matmul %21, %22, %cst_20 {dimension_numbers = #tpu.dot_dimension_numbers<[1], [0], [0], [1], [0, 0, 1, 1], [], []>} : vector<48x128xf32>, vector<128x128xf32>, vector<48x128xf32> -> vector<48x128xf32>
    %c0_21 = arith.constant 0 : index
    %c0_22 = arith.constant 0 : index
    %24 = vector.load %arg9[%c0_21, %c0_22] : memref<1x128xf32, #tpu.memory_space<vmem>>, vector<1x128xf32>
    %25 = vector.broadcast %24 : vector<1x128xf32> to vector<48x128xf32>
    %26 = arith.addf %23, %25 : vector<48x128xf32>
    %c0_23 = arith.constant 0 : index
    %c0_24 = arith.constant 0 : index
    %27 = vector.load %arg10[%c0_23, %c0_24] : memref<48x128xf32, #tpu.memory_space<vmem>>, vector<48x128xf32>
    tpu.vector_store %arg10[%c0_23, %c0_24], %26 {strides = array<i32>} : memref<48x128xf32, #tpu.memory_space<vmem>>, vector<48x128xf32>,
    return
  }
  func.func @transform_0(%arg0: i32) -> (i32, i32) {
    %c0_i32 = arith.constant 0 : i32
    %c0_i32_0 = arith.constant 0 : i32
    return %arg0, %c0_i32 : i32, i32
  }
  func.func @transform_1(%arg0: i32) -> (i32, i32) {
    %c0_i32 = arith.constant 0 : i32
    %c0_i32_0 = arith.constant 0 : i32
    %c0_i32_1 = arith.constant 0 : i32
    return %c0_i32, %c0_i32_0 : i32, i32
  }
  func.func @transform_2(%arg0: i32) -> (i32, i32) {
    %c0_i32 = arith.constant 0 : i32
    %c0_i32_0 = arith.constant 0 : i32
    %c0_i32_1 = arith.constant 0 : i32
    return %c0_i32, %c0_i32_0 : i32, i32
  }
  func.func @transform_3(%arg0: i32) -> (i32, i32) {
    %c0_i32 = arith.constant 0 : i32
    %c0_i32_0 = arith.constant 0 : i32
    %c0_i32_1 = arith.constant 0 : i32
    return %c0_i32, %c0_i32_0 : i32, i32
  }
  func.func @transform_4(%arg0: i32) -> (i32, i32) {
    %c0_i32 = arith.constant 0 : i32
    %c0_i32_0 = arith.constant 0 : i32
    %c0_i32_1 = arith.constant 0 : i32
    return %c0_i32, %c0_i32_0 : i32, i32
  }
  func.func @transform_5(%arg0: i32) -> (i32, i32) {
    %c0_i32 = arith.constant 0 : i32
    %c0_i32_0 = arith.constant 0 : i32
    %c0_i32_1 = arith.constant 0 : i32
    return %c0_i32, %c0_i32_0 : i32, i32
  }
  func.func @transform_6(%arg0: i32) -> (i32, i32) {
    %c0_i32 = arith.constant 0 : i32
    %c0_i32_0 = arith.constant 0 : i32
    %c0_i32_1 = arith.constant 0 : i32
    return %c0_i32, %c0_i32_0 : i32, i32
  }
  func.func @transform_7(%arg0: i32) -> (i32, i32) {
    %c0_i32 = arith.constant 0 : i32
    %c0_i32_0 = arith.constant 0 : i32
    %c0_i32_1 = arith.constant 0 : i32
    return %c0_i32, %c0_i32_0 : i32, i32
  }
  func.func @transform_8(%arg0: i32) -> (i32, i32) {
    %c0_i32 = arith.constant 0 : i32
    %c0_i32_0 = arith.constant 0 : i32
    %c0_i32_1 = arith.constant 0 : i32
    return %c0_i32, %c0_i32_0 : i32, i32
  }
  func.func @transform_9(%arg0: i32) -> (i32, i32) {
    %c0_i32 = arith.constant 0 : i32
    %c0_i32_0 = arith.constant 0 : i32
    return %arg0, %c0_i32 : i32, i32
  }
}

</mosaic_0001>

<llo_original>
// kernel: lightweight_ann_forward.1
$region0: #{lightweight_ann_forward.1}
  #allocation0 [shape = 'u32[]', space=smem, size = 0x4, offset = 0x4, fixed_abs, tag = 'smem constant byte address 0x4 - core index']
  #allocation1 [shape = 'u32[144,128]{1,0:T(1,128)}', space=vmem, size = 0x12000, scoped, tag = 'internal scratch']
  %s0 = inlined_call_operand.vmem [shape: f32[48,128], index: 0, kind: input, shape index: {}]
  %s1 = inlined_call_operand.vmem [shape: f32[128,256], index: 1, kind: input, shape index: {}]
  %s2 = inlined_call_operand.vmem [shape: f32[1,256], index: 2, kind: input, shape index: {}]
  %s3 = inlined_call_operand.vmem [shape: f32[256,128], index: 3, kind: input, shape index: {}]
  %s4 = inlined_call_operand.vmem [shape: f32[1,128], index: 4, kind: input, shape index: {}]
  %s5 = inlined_call_operand.vmem [shape: f32[128,128], index: 5, kind: input, shape index: {}]
  %s6 = inlined_call_operand.vmem [shape: f32[1,128], index: 6, kind: input, shape index: {}]
  %s7 = inlined_call_operand.vmem [shape: f32[128,128], index: 7, kind: input, shape index: {}]
  %s8 = inlined_call_operand.vmem [shape: f32[1,128], index: 8, kind: input, shape index: {}]
  %s9 = inlined_call_operand.vmem [shape: f32[48,128], index: 9, kind: output, shape index: {}]
  %s10 = sld [smem:[#allocation0]]
  $region46: #{lightweight_ann_forward.1} parent=0
    _
  %s12 = ssub.s32 1, %s10
  %s13 = scalar_select 0, %s12, %s10
  // Predicated region
  $region2: #{lightweight_ann_forward.1} parent=0 // pred_check
    _
  $region3: #{lightweight_ann_forward.1} parent=0 // pred_check_branch
    %15 = sbr.rel (0) target = $region5
  $region4: #{lightweight_ann_forward.1} parent=0 // pred_region
    _
  $region5: #{lightweight_ann_forward.1} parent=0 // pred_fallthru
    _
  // Predicated region
  $region6: #{lightweight_ann_forward.1} parent=0 // pred_check
    _
  $region7: #{lightweight_ann_forward.1} parent=0 // pred_check_branch
    %17 = sbr.rel (0) target = $region9
  $region8: #{lightweight_ann_forward.1} parent=0 // pred_region
    _
  $region9: #{lightweight_ann_forward.1} parent=0 // pred_fallthru
    _
  // Predicated region
  $region10: #{lightweight_ann_forward.1} parent=0 // pred_check
    _
  $region11: #{lightweight_ann_forward.1} parent=0 // pred_check_branch
    %19 = sbr.rel (0) target = $region13
  $region12: #{lightweight_ann_forward.1} parent=0 // pred_region
    _
  $region13: #{lightweight_ann_forward.1} parent=0 // pred_fallthru
    _
  // Predicated region
  $region14: #{lightweight_ann_forward.1} parent=0 // pred_check
    _
  $region15: #{lightweight_ann_forward.1} parent=0 // pred_check_branch
    %21 = sbr.rel (0) target = $region17
  $region16: #{lightweight_ann_forward.1} parent=0 // pred_region
    _
  $region17: #{lightweight_ann_forward.1} parent=0 // pred_fallthru
    _
  // Predicated region
  $region18: #{lightweight_ann_forward.1} parent=0 // pred_check
    _
  $region19: #{lightweight_ann_forward.1} parent=0 // pred_check_branch
    %23 = sbr.rel (0) target = $region21
  $region20: #{lightweight_ann_forward.1} parent=0 // pred_region
    _
  $region21: #{lightweight_ann_forward.1} parent=0 // pred_fallthru
    _
  // Predicated region
  $region22: #{lightweight_ann_forward.1} parent=0 // pred_check
    _
  $region23: #{lightweight_ann_forward.1} parent=0 // pred_check_branch
    %25 = sbr.rel (0) target = $region25
  $region24: #{lightweight_ann_forward.1} parent=0 // pred_region
    _
  $region25: #{lightweight_ann_forward.1} parent=0 // pred_fallthru
    _
  // Predicated region
  $region26: #{lightweight_ann_forward.1} parent=0 // pred_check
    _
  $region27: #{lightweight_ann_forward.1} parent=0 // pred_check_branch
    %27 = sbr.rel (0) target = $region29
  $region28: #{lightweight_ann_forward.1} parent=0 // pred_region
    _
  $region29: #{lightweight_ann_forward.1} parent=0 // pred_fallthru
    _
  // Predicated region
  $region30: #{lightweight_ann_forward.1} parent=0 // pred_check
    _
  $region31: #{lightweight_ann_forward.1} parent=0 // pred_check_branch
    %29 = sbr.rel (0) target = $region33
  $region32: #{lightweight_ann_forward.1} parent=0 // pred_region
    _
  $region33: #{lightweight_ann_forward.1} parent=0 // pred_fallthru
    _
  // Predicated region
  $region34: #{lightweight_ann_forward.1} parent=0 // pred_check
    _
  $region35: #{lightweight_ann_forward.1} parent=0 // pred_check_branch
    %31 = sbr.rel (0) target = $region37
  $region36: #{lightweight_ann_forward.1} parent=0 // pred_region
    _
  $region37: #{lightweight_ann_forward.1} parent=0 // pred_fallthru
    _
  %v32 = vld [vmem:[%s0] sm:$0xff]
  %v33 = vld [vmem:[%s0 + $0x8] sm:$0xff]
  %v34 = vld [vmem:[%s0 + $0x10] sm:$0xff]
  %v35 = vld [vmem:[%s0 + $0x18] sm:$0xff]
  %v36 = vld [vmem:[%s0 + $0x20] sm:$0xff]
  %v37 = vld [vmem:[%s0 + $0x28] sm:$0xff]
  %v38 = vld [vmem:[%s1] sm:$0xff]
  %v39 = vld [vmem:[%s1 + $0x8] sm:$0xff]
  %v40 = vld [vmem:[%s1 + $0x10] sm:$0xff]
  %v41 = vld [vmem:[%s1 + $0x18] sm:$0xff]
  %v42 = vld [vmem:[%s1 + $0x20] sm:$0xff]
  %v43 = vld [vmem:[%s1 + $0x28] sm:$0xff]
  %v44 = vld [vmem:[%s1 + $0x30] sm:$0xff]
  %v45 = vld [vmem:[%s1 + $0x38] sm:$0xff]
  %v46 = vld [vmem:[%s1 + $0x40] sm:$0xff]
  %v47 = vld [vmem:[%s1 + $0x48] sm:$0xff]
  %v48 = vld [vmem:[%s1 + $0x50] sm:$0xff]
  %v49 = vld [vmem:[%s1 + $0x58] sm:$0xff]
  %v50 = vld [vmem:[%s1 + $0x60] sm:$0xff]
  %v51 = vld [vmem:[%s1 + $0x68] sm:$0xff]
  %v52 = vld [vmem:[%s1 + $0x70] sm:$0xff]
  %v53 = vld [vmem:[%s1 + $0x78] sm:$0xff]
  %v54 = vld [vmem:[%s1 + $0x80] sm:$0xff]
  %v55 = vld [vmem:[%s1 + $0x88] sm:$0xff]
  %v56 = vld [vmem:[%s1 + $0x90] sm:$0xff]
  %v57 = vld [vmem:[%s1 + $0x98] sm:$0xff]
  %v58 = vld [vmem:[%s1 + $0xa0] sm:$0xff]
  %v59 = vld [vmem:[%s1 + $0xa8] sm:$0xff]
  %v60 = vld [vmem:[%s1 + $0xb0] sm:$0xff]
  %v61 = vld [vmem:[%s1 + $0xb8] sm:$0xff]
  %v62 = vld [vmem:[%s1 + $0xc0] sm:$0xff]
  %v63 = vld [vmem:[%s1 + $0xc8] sm:$0xff]
  %v64 = vld [vmem:[%s1 + $0xd0] sm:$0xff]
  %v65 = vld [vmem:[%s1 + $0xd8] sm:$0xff]
  %v66 = vld [vmem:[%s1 + $0xe0] sm:$0xff]
  %v67 = vld [vmem:[%s1 + $0xe8] sm:$0xff]
  %v68 = vld [vmem:[%s1 + $0xf0] sm:$0xff]
  %v69 = vld [vmem:[%s1 + $0xf8] sm:$0xff]
  %v70 = vld [vmem:[%s2] sm:$0x3]
  %v72 = vlaneseq
  %v73 = vshrl.u32 %v72, 7
  %v74 = vsub.s32 0, %v73
  %v75 = vrot.slane %v70, %v74
  %v76 = vlaneseq
  %v77 = vshrl.u32 %v76, 7
  %v78 = vsub.s32 1, %v77
  %v79 = vrot.slane %v70, %v78
  %82 = vmatprep.subr.mxu0 %v39
  %83 = vmatpush1.msra.mxu0 %v38
  %84 = vmatprep.subr.mxu0 %v41
  %85 = vmatpush1.msra.mxu0 %v40
  %86 = vmatprep.subr.mxu0 %v43
  %87 = vmatpush1.msra.mxu0 %v42
  %88 = vmatprep.subr.mxu0 %v45
  %89 = vmatpush1.msra.mxu0 %v44
  %90 = vmatprep.subr.mxu0 %v47
  %91 = vmatpush1.msra.mxu0 %v46
  %92 = vmatprep.subr.mxu0 %v49
  %93 = vmatpush1.msra.mxu0 %v48
  %94 = vmatprep.subr.mxu0 %v51
  %95 = vmatpush1.msra.mxu0 %v50
  %96 = vmatprep.subr.mxu0 %v53
  %97 = vmatpush1.msra.mxu0 %v52
  %98 = vmatprep.subr.mxu0 %v55
  %99 = vmatpush1.msra.mxu0 %v54
  %100 = vmatprep.subr.mxu0 %v57
  %101 = vmatpush1.msra.mxu0 %v56
  %102 = vmatprep.subr.mxu0 %v59
  %103 = vmatpush1.msra.mxu0 %v58
  %104 = vmatprep.subr.mxu0 %v61
  %105 = vmatpush1.msra.mxu0 %v60
  %106 = vmatprep.subr.mxu0 %v63
  %107 = vmatpush1.msra.mxu0 %v62
  %108 = vmatprep.subr.mxu0 %v65
  %109 = vmatpush1.msra.mxu0 %v64
  %110 = vmatprep.subr.mxu0 %v67
  %111 = vmatpush1.msra.mxu0 %v66
  %112 = vmatprep.subr.mxu0 %v69
  %113 = vmatpush1.msra.mxu0 %v68
  %114 = vmatprep.subr.mxu0 0.0
  %115 = vmatpush1.msra.mxu0 0.0
  %116 = vmatprep.subr.mxu0 0.0
  %117 = vmatpush1.msra.mxu0 0.0
  %118 = vmatprep.subr.mxu0 0.0
  %119 = vmatpush1.msra.mxu0 0.0
  %120 = vmatprep.subr.mxu0 0.0
  %121 = vmatpush1.msra.mxu0 0.0
  %122 = vmatprep.subr.mxu0 0.0
  %123 = vmatpush1.msra.mxu0 0.0
  %124 = vmatprep.subr.mxu0 0.0
  %125 = vmatpush1.msra.mxu0 0.0
  %126 = vmatprep.subr.mxu0 0.0
  %127 = vmatpush1.msra.mxu0 0.0
  %128 = vmatprep.subr.mxu0 0.0
  %129 = vmatpush1.msra.mxu0 0.0
  %130 = vmatprep.subr.mxu0 0.0
  %131 = vmatpush1.msra.mxu0 0.0
  %132 = vmatprep.subr.mxu0 0.0
  %133 = vmatpush1.msra.mxu0 0.0
  %134 = vmatprep.subr.mxu0 0.0
  %135 = vmatpush1.msra.mxu0 0.0
  %136 = vmatprep.subr.mxu0 0.0
  %137 = vmatpush1.msra.mxu0 0.0
  %138 = vmatprep.subr.mxu0 0.0
  %139 = vmatpush1.msra.mxu0 0.0
  %140 = vmatprep.subr.mxu0 0.0
  %141 = vmatpush1.msra.mxu0 0.0
  %142 = vmatprep.subr.mxu0 0.0
  %143 = vmatpush1.msra.mxu0 0.0
  %144 = vmatprep.subr.mxu0 0.0
  %145 = vmatpush1.msra.mxu0 0.0
  %146 = vmatprep.mubr.f32.mxu0 0.0
  %147 = vmatmul.mubr.f32.gmra.mrb[0].mxu0 %v32
  %v148 = vpop.f32.mrb[0].mxu0
  %v149 = vadd.f32 %v75, %v148
  %v150 = vpop.f32.mrb[0].mxu0
  %v151 = vadd.f32 %v79, %v150
  %152 = vmatprep.mubr.f32.mxu0 0.0
  %153 = vmatmul.mubr.f32.gmra.mrb[0].mxu0 %v33
  %v154 = vpop.f32.mrb[0].mxu0
  %v155 = vadd.f32 %v75, %v154
  %v156 = vpop.f32.mrb[0].mxu0
  %v157 = vadd.f32 %v79, %v156
  %158 = vmatprep.mubr.f32.mxu0 0.0
  %159 = vmatmul.mubr.f32.gmra.mrb[0].mxu0 %v34
  %v160 = vpop.f32.mrb[0].mxu0
  %v161 = vadd.f32 %v75, %v160
  %v162 = vpop.f32.mrb[0].mxu0
  %v163 = vadd.f32 %v79, %v162
  %164 = vmatprep.mubr.f32.mxu0 0.0
  %165 = vmatmul.mubr.f32.gmra.mrb[0].mxu0 %v35
  %v166 = vpop.f32.mrb[0].mxu0
  %v167 = vadd.f32 %v75, %v166
  %v168 = vpop.f32.mrb[0].mxu0
  %v169 = vadd.f32 %v79, %v168
  %170 = vmatprep.mubr.f32.mxu0 0.0
  %171 = vmatmul.mubr.f32.gmra.mrb[0].mxu0 %v36
  %v172 = vpop.f32.mrb[0].mxu0
  %v173 = vadd.f32 %v75, %v172
  %v174 = vpop.f32.mrb[0].mxu0
  %v175 = vadd.f32 %v79, %v174
  %176 = vmatprep.mubr.f32.mxu0 0.0
  %177 = vmatmul.mubr.f32.gmra.mrb[0].mxu0 %v37
  %v178 = vpop.f32.mrb[0].mxu0
  %v179 = vadd.f32 %v75, %v178
  %v180 = vpop.f32.mrb[0].mxu0
  %v181 = vadd.f32 %v79, %v180
  %182 = vdwg.mxu0
  %v183 = vmax.f32 %v149, 0.0
  %v184 = vmax.f32 %v151, 0.0
  %v185 = vmax.f32 %v155, 0.0
  %v186 = vmax.f32 %v157, 0.0
  %v187 = vmax.f32 %v161, 0.0
  %v188 = vmax.f32 %v163, 0.0
  %v189 = vmax.f32 %v167, 0.0
  %v190 = vmax.f32 %v169, 0.0
  %v191 = vmax.f32 %v173, 0.0
  %v192 = vmax.f32 %v175, 0.0
  %v193 = vmax.f32 %v179, 0.0
  %v194 = vmax.f32 %v181, 0.0
  %v195 = vld [vmem:[%s3] sm:$0xff]
  %v196 = vld [vmem:[%s3 + $0x8] sm:$0xff]
  %v197 = vld [vmem:[%s3 + $0x10] sm:$0xff]
  %v198 = vld [vmem:[%s3 + $0x18] sm:$0xff]
  %v199 = vld [vmem:[%s3 + $0x20] sm:$0xff]
  %v200 = vld [vmem:[%s3 + $0x28] sm:$0xff]
  %v201 = vld [vmem:[%s3 + $0x30] sm:$0xff]
  %v202 = vld [vmem:[%s3 + $0x38] sm:$0xff]
  %v203 = vld [vmem:[%s3 + $0x40] sm:$0xff]
  %v204 = vld [vmem:[%s3 + $0x48] sm:$0xff]
  %v205 = vld [vmem:[%s3 + $0x50] sm:$0xff]
  %v206 = vld [vmem:[%s3 + $0x58] sm:$0xff]
  %v207 = vld [vmem:[%s3 + $0x60] sm:$0xff]
  %v208 = vld [vmem:[%s3 + $0x68] sm:$0xff]
  %v209 = vld [vmem:[%s3 + $0x70] sm:$0xff]
  %v210 = vld [vmem:[%s3 + $0x78] sm:$0xff]
  %v211 = vld [vmem:[%s3 + $0x80] sm:$0xff]
  %v212 = vld [vmem:[%s3 + $0x88] sm:$0xff]
  %v213 = vld [vmem:[%s3 + $0x90] sm:$0xff]
  %v214 = vld [vmem:[%s3 + $0x98] sm:$0xff]
  %v215 = vld [vmem:[%s3 + $0xa0] sm:$0xff]
  %v216 = vld [vmem:[%s3 + $0xa8] sm:$0xff]
  %v217 = vld [vmem:[%s3 + $0xb0] sm:$0xff]
  %v218 = vld [vmem:[%s3 + $0xb8] sm:$0xff]
  %v219 = vld [vmem:[%s3 + $0xc0] sm:$0xff]
  %v220 = vld [vmem:[%s3 + $0xc8] sm:$0xff]
  %v221 = vld [vmem:[%s3 + $0xd0] sm:$0xff]
  %v222 = vld [vmem:[%s3 + $0xd8] sm:$0xff]
  %v223 = vld [vmem:[%s3 + $0xe0] sm:$0xff]
  %v224 = vld [vmem:[%s3 + $0xe8] sm:$0xff]
  %v225 = vld [vmem:[%s3 + $0xf0] sm:$0xff]
  %v226 = vld [vmem:[%s3 + $0xf8] sm:$0xff]
  %v227 = vld [vmem:[%s4] sm:$0x1]
  %v229 = vlaneseq
  %v230 = vshrl.u32 %v229, 7
  %v231 = vsub.s32 0, %v230
  %v232 = vrot.slane %v227, %v231
  %234 = vmatprep.subr.mxu0 0.0
  %235 = vmatpush1.msra.mxu0 %v195
  %236 = vmatprep.subr.mxu0 0.0
  %237 = vmatpush1.msra.mxu0 %v196
  %238 = vmatprep.subr.mxu0 0.0
  %239 = vmatpush1.msra.mxu0 %v197
  %240 = vmatprep.subr.mxu0 0.0
  %241 = vmatpush1.msra.mxu0 %v198
  %242 = vmatprep.subr.mxu0 0.0
  %243 = vmatpush1.msra.mxu0 %v199
  %244 = vmatprep.subr.mxu0 0.0
  %245 = vmatpush1.msra.mxu0 %v200
  %246 = vmatprep.subr.mxu0 0.0
  %247 = vmatpush1.msra.mxu0 %v201
  %248 = vmatprep.subr.mxu0 0.0
  %249 = vmatpush1.msra.mxu0 %v202
  %250 = vmatprep.subr.mxu0 0.0
  %251 = vmatpush1.msra.mxu0 %v203
  %252 = vmatprep.subr.mxu0 0.0
  %253 = vmatpush1.msra.mxu0 %v204
  %254 = vmatprep.subr.mxu0 0.0
  %255 = vmatpush1.msra.mxu0 %v205
  %256 = vmatprep.subr.mxu0 0.0
  %257 = vmatpush1.msra.mxu0 %v206
  %258 = vmatprep.subr.mxu0 0.0
  %259 = vmatpush1.msra.mxu0 %v207
  %260 = vmatprep.subr.mxu0 0.0
  %261 = vmatpush1.msra.mxu0 %v208
  %262 = vmatprep.subr.mxu0 0.0
  %263 = vmatpush1.msra.mxu0 %v209
  %264 = vmatprep.subr.mxu0 0.0
  %265 = vmatpush1.msra.mxu0 %v210
  %266 = vmatprep.subr.mxu0 0.0
  %267 = vmatpush1.msra.mxu0 %v211
  %268 = vmatprep.subr.mxu0 0.0
  %269 = vmatpush1.msra.mxu0 %v212
  %270 = vmatprep.subr.mxu0 0.0
  %271 = vmatpush1.msra.mxu0 %v213
  %272 = vmatprep.subr.mxu0 0.0
  %273 = vmatpush1.msra.mxu0 %v214
  %274 = vmatprep.subr.mxu0 0.0
  %275 = vmatpush1.msra.mxu0 %v215
  %276 = vmatprep.subr.mxu0 0.0
  %277 = vmatpush1.msra.mxu0 %v216
  %278 = vmatprep.subr.mxu0 0.0
  %279 = vmatpush1.msra.mxu0 %v217
  %280 = vmatprep.subr.mxu0 0.0
  %281 = vmatpush1.msra.mxu0 %v218
  %282 = vmatprep.subr.mxu0 0.0
  %283 = vmatpush1.msra.mxu0 %v219
  %284 = vmatprep.subr.mxu0 0.0
  %285 = vmatpush1.msra.mxu0 %v220
  %286 = vmatprep.subr.mxu0 0.0
  %287 = vmatpush1.msra.mxu0 %v221
  %288 = vmatprep.subr.mxu0 0.0
  %289 = vmatpush1.msra.mxu0 %v222
  %290 = vmatprep.subr.mxu0 0.0
  %291 = vmatpush1.msra.mxu0 %v223
  %292 = vmatprep.subr.mxu0 0.0
  %293 = vmatpush1.msra.mxu0 %v224
  %294 = vmatprep.subr.mxu0 0.0
  %295 = vmatpush1.msra.mxu0 %v225
  %296 = vmatprep.subr.mxu0 0.0
  %297 = vmatpush1.msra.mxu0 %v226
  %298 = vmatprep.mubr.f32.mxu0 %v184
  %299 = vmatmul.mubr.f32.gmra.mrb[0].mxu0 %v183
  %v300 = vpop.f32.mrb[0].mxu0
  %v301 = vadd.f32 %v232, %v300
  %v302 = vpop.f32.mrb[0].mxu0
  %303 = vmatprep.mubr.f32.mxu0 %v186
  %304 = vmatmul.mubr.f32.gmra.mrb[0].mxu0 %v185
  %v305 = vpop.f32.mrb[0].mxu0
  %v306 = vadd.f32 %v232, %v305
  %v307 = vpop.f32.mrb[0].mxu0
  %308 = vmatprep.mubr.f32.mxu0 %v188
  %309 = vmatmul.mubr.f32.gmra.mrb[0].mxu0 %v187
  %v310 = vpop.f32.mrb[0].mxu0
  %v311 = vadd.f32 %v232, %v310
  %v312 = vpop.f32.mrb[0].mxu0
  %313 = vmatprep.mubr.f32.mxu0 %v190
  %314 = vmatmul.mubr.f32.gmra.mrb[0].mxu0 %v189
  %v315 = vpop.f32.mrb[0].mxu0
  %v316 = vadd.f32 %v232, %v315
  %v317 = vpop.f32.mrb[0].mxu0
  %318 = vmatprep.mubr.f32.mxu0 %v192
  %319 = vmatmul.mubr.f32.gmra.mrb[0].mxu0 %v191
  %v320 = vpop.f32.mrb[0].mxu0
  %v321 = vadd.f32 %v232, %v320
  %v322 = vpop.f32.mrb[0].mxu0
  %323 = vmatprep.mubr.f32.mxu0 %v194
  %324 = vmatmul.mubr.f32.gmra.mrb[0].mxu0 %v193
  %v325 = vpop.f32.mrb[0].mxu0
  %v326 = vadd.f32 %v232, %v325
  %v327 = vpop.f32.mrb[0].mxu0
  %328 = vdwg.mxu0
  %v329 = vmax.f32 %v301, 0.0
  %v330 = vmax.f32 %v306, 0.0
  %v331 = vmax.f32 %v311, 0.0
  %v332 = vmax.f32 %v316, 0.0
  %v333 = vmax.f32 %v321, 0.0
  %v334 = vmax.f32 %v326, 0.0
  %v335 = vld [vmem:[%s5] sm:$0xff]
  %v336 = vld [vmem:[%s5 + $0x8] sm:$0xff]
  %v337 = vld [vmem:[%s5 + $0x10] sm:$0xff]
  %v338 = vld [vmem:[%s5 + $0x18] sm:$0xff]
  %v339 = vld [vmem:[%s5 + $0x20] sm:$0xff]
  %v340 = vld [vmem:[%s5 + $0x28] sm:$0xff]
  %v341 = vld [vmem:[%s5 + $0x30] sm:$0xff]
  %v342 = vld [vmem:[%s5 + $0x38] sm:$0xff]
  %v343 = vld [vmem:[%s5 + $0x40] sm:$0xff]
  %v344 = vld [vmem:[%s5 + $0x48] sm:$0xff]
  %v345 = vld [vmem:[%s5 + $0x50] sm:$0xff]
  %v346 = vld [vmem:[%s5 + $0x58] sm:$0xff]
  %v347 = vld [vmem:[%s5 + $0x60] sm:$0xff]
  %v348 = vld [vmem:[%s5 + $0x68] sm:$0xff]
  %v349 = vld [vmem:[%s5 + $0x70] sm:$0xff]
  %v350 = vld [vmem:[%s5 + $0x78] sm:$0xff]
  %v351 = vld [vmem:[%s6] sm:$0x1]
  %v353 = vlaneseq
  %v354 = vshrl.u32 %v353, 7
  %v355 = vsub.s32 0, %v354
  %v356 = vrot.slane %v351, %v355
  %358 = vmatprep.subr.mxu0 0.0
  %359 = vmatpush1.msra.mxu0 %v335
  %360 = vmatprep.subr.mxu0 0.0
  %361 = vmatpush1.msra.mxu0 %v336
  %362 = vmatprep.subr.mxu0 0.0
  %363 = vmatpush1.msra.mxu0 %v337
  %364 = vmatprep.subr.mxu0 0.0
  %365 = vmatpush1.msra.mxu0 %v338
  %366 = vmatprep.subr.mxu0 0.0
  %367 = vmatpush1.msra.mxu0 %v339
  %368 = vmatprep.subr.mxu0 0.0
  %369 = vmatpush1.msra.mxu0 %v340
  %370 = vmatprep.subr.mxu0 0.0
  %371 = vmatpush1.msra.mxu0 %v341
  %372 = vmatprep.subr.mxu0 0.0
  %373 = vmatpush1.msra.mxu0 %v342
  %374 = vmatprep.subr.mxu0 0.0
  %375 = vmatpush1.msra.mxu0 %v343
  %376 = vmatprep.subr.mxu0 0.0
  %377 = vmatpush1.msra.mxu0 %v344
  %378 = vmatprep.subr.mxu0 0.0
  %379 = vmatpush1.msra.mxu0 %v345
  %380 = vmatprep.subr.mxu0 0.0
  %381 = vmatpush1.msra.mxu0 %v346
  %382 = vmatprep.subr.mxu0 0.0
  %383 = vmatpush1.msra.mxu0 %v347
  %384 = vmatprep.subr.mxu0 0.0
  %385 = vmatpush1.msra.mxu0 %v348
  %386 = vmatprep.subr.mxu0 0.0
  %387 = vmatpush1.msra.mxu0 %v349
  %388 = vmatprep.subr.mxu0 0.0
  %389 = vmatpush1.msra.mxu0 %v350
  %390 = vmatprep.subr.mxu0 0.0
  %391 = vmatpush1.msra.mxu0 0.0
  %392 = vmatprep.subr.mxu0 0.0
  %393 = vmatpush1.msra.mxu0 0.0
  %394 = vmatprep.subr.mxu0 0.0
  %395 = vmatpush1.msra.mxu0 0.0
  %396 = vmatprep.subr.mxu0 0.0
  %397 = vmatpush1.msra.mxu0 0.0
  %398 = vmatprep.subr.mxu0 0.0
  %399 = vmatpush1.msra.mxu0 0.0
  %400 = vmatprep.subr.mxu0 0.0
  %401 = vmatpush1.msra.mxu0 0.0
  %402 = vmatprep.subr.mxu0 0.0
  %403 = vmatpush1.msra.mxu0 0.0
  %404 = vmatprep.subr.mxu0 0.0
  %405 = vmatpush1.msra.mxu0 0.0
  %406 = vmatprep.subr.mxu0 0.0
  %407 = vmatpush1.msra.mxu0 0.0
  %408 = vmatprep.subr.mxu0 0.0
  %409 = vmatpush1.msra.mxu0 0.0
  %410 = vmatprep.subr.mxu0 0.0
  %411 = vmatpush1.msra.mxu0 0.0
  %412 = vmatprep.subr.mxu0 0.0
  %413 = vmatpush1.msra.mxu0 0.0
  %414 = vmatprep.subr.mxu0 0.0
  %415 = vmatpush1.msra.mxu0 0.0
  %416 = vmatprep.subr.mxu0 0.0
  %417 = vmatpush1.msra.mxu0 0.0
  %418 = vmatprep.subr.mxu0 0.0
  %419 = vmatpush1.msra.mxu0 0.0
  %420 = vmatprep.subr.mxu0 0.0
  %421 = vmatpush1.msra.mxu0 0.0
  %422 = vmatprep.mubr.f32.mxu0 0.0
  %423 = vmatmul.mubr.f32.gmra.mrb[0].mxu0 %v329
  %v424 = vpop.f32.mrb[0].mxu0
  %v425 = vadd.f32 %v356, %v424
  %v426 = vpop.f32.mrb[0].mxu0
  %427 = vmatprep.mubr.f32.mxu0 0.0
  %428 = vmatmul.mubr.f32.gmra.mrb[0].mxu0 %v330
  %v429 = vpop.f32.mrb[0].mxu0
  %v430 = vadd.f32 %v356, %v429
  %v431 = vpop.f32.mrb[0].mxu0
  %432 = vmatprep.mubr.f32.mxu0 0.0
  %433 = vmatmul.mubr.f32.gmra.mrb[0].mxu0 %v331
  %v434 = vpop.f32.mrb[0].mxu0
  %v435 = vadd.f32 %v356, %v434
  %v436 = vpop.f32.mrb[0].mxu0
  %437 = vmatprep.mubr.f32.mxu0 0.0
  %438 = vmatmul.mubr.f32.gmra.mrb[0].mxu0 %v332
  %v439 = vpop.f32.mrb[0].mxu0
  %v440 = vadd.f32 %v356, %v439
  %v441 = vpop.f32.mrb[0].mxu0
  %442 = vmatprep.mubr.f32.mxu0 0.0
  %443 = vmatmul.mubr.f32.gmra.mrb[0].mxu0 %v333
  %v444 = vpop.f32.mrb[0].mxu0
  %v445 = vadd.f32 %v356, %v444
  %v446 = vpop.f32.mrb[0].mxu0
  %447 = vmatprep.mubr.f32.mxu0 0.0
  %448 = vmatmul.mubr.f32.gmra.mrb[0].mxu0 %v334
  %v449 = vpop.f32.mrb[0].mxu0
  %v450 = vadd.f32 %v356, %v449
  %v451 = vpop.f32.mrb[0].mxu0
  %452 = vdwg.mxu0
  %v453 = vmax.f32 %v425, 0.0
  %v454 = vmax.f32 %v430, 0.0
  %v455 = vmax.f32 %v435, 0.0
  %v456 = vmax.f32 %v440, 0.0
  %v457 = vmax.f32 %v445, 0.0
  %v458 = vmax.f32 %v450, 0.0
  %v459 = vld [vmem:[%s7] sm:$0xff]
  %v460 = vld [vmem:[%s7 + $0x8] sm:$0xff]
  %v461 = vld [vmem:[%s7 + $0x10] sm:$0xff]
  %v462 = vld [vmem:[%s7 + $0x18] sm:$0xff]
  %v463 = vld [vmem:[%s7 + $0x20] sm:$0xff]
  %v464 = vld [vmem:[%s7 + $0x28] sm:$0xff]
  %v465 = vld [vmem:[%s7 + $0x30] sm:$0xff]
  %v466 = vld [vmem:[%s7 + $0x38] sm:$0xff]
  %v467 = vld [vmem:[%s7 + $0x40] sm:$0xff]
  %v468 = vld [vmem:[%s7 + $0x48] sm:$0xff]
  %v469 = vld [vmem:[%s7 + $0x50] sm:$0xff]
  %v470 = vld [vmem:[%s7 + $0x58] sm:$0xff]
  %v471 = vld [vmem:[%s7 + $0x60] sm:$0xff]
  %v472 = vld [vmem:[%s7 + $0x68] sm:$0xff]
  %v473 = vld [vmem:[%s7 + $0x70] sm:$0xff]
  %v474 = vld [vmem:[%s7 + $0x78] sm:$0xff]
  %v475 = vld [vmem:[%s8] sm:$0x1]
  %v477 = vlaneseq
  %v478 = vshrl.u32 %v477, 7
  %v479 = vsub.s32 0, %v478
  %v480 = vrot.slane %v475, %v479
  %482 = vmatprep.subr.mxu0 0.0
  %483 = vmatpush1.msra.mxu0 %v459
  %484 = vmatprep.subr.mxu0 0.0
  %485 = vmatpush1.msra.mxu0 %v460
  %486 = vmatprep.subr.mxu0 0.0
  %487 = vmatpush1.msra.mxu0 %v461
  %488 = vmatprep.subr.mxu0 0.0
  %489 = vmatpush1.msra.mxu0 %v462
  %490 = vmatprep.subr.mxu0 0.0
  %491 = vmatpush1.msra.mxu0 %v463
  %492 = vmatprep.subr.mxu0 0.0
  %493 = vmatpush1.msra.mxu0 %v464
  %494 = vmatprep.subr.mxu0 0.0
  %495 = vmatpush1.msra.mxu0 %v465
  %496 = vmatprep.subr.mxu0 0.0
  %497 = vmatpush1.msra.mxu0 %v466
  %498 = vmatprep.subr.mxu0 0.0
  %499 = vmatpush1.msra.mxu0 %v467
  %500 = vmatprep.subr.mxu0 0.0
  %501 = vmatpush1.msra.mxu0 %v468
  %502 = vmatprep.subr.mxu0 0.0
  %503 = vmatpush1.msra.mxu0 %v469
  %504 = vmatprep.subr.mxu0 0.0
  %505 = vmatpush1.msra.mxu0 %v470
  %506 = vmatprep.subr.mxu0 0.0
  %507 = vmatpush1.msra.mxu0 %v471
  %508 = vmatprep.subr.mxu0 0.0
  %509 = vmatpush1.msra.mxu0 %v472
  %510 = vmatprep.subr.mxu0 0.0
  %511 = vmatpush1.msra.mxu0 %v473
  %512 = vmatprep.subr.mxu0 0.0
  %513 = vmatpush1.msra.mxu0 %v474
  %514 = vmatprep.subr.mxu0 0.0
  %515 = vmatpush1.msra.mxu0 0.0
  %516 = vmatprep.subr.mxu0 0.0
  %517 = vmatpush1.msra.mxu0 0.0
  %518 = vmatprep.subr.mxu0 0.0
  %519 = vmatpush1.msra.mxu0 0.0
  %520 = vmatprep.subr.mxu0 0.0
  %521 = vmatpush1.msra.mxu0 0.0
  %522 = vmatprep.subr.mxu0 0.0
  %523 = vmatpush1.msra.mxu0 0.0
  %524 = vmatprep.subr.mxu0 0.0
  %525 = vmatpush1.msra.mxu0 0.0
  %526 = vmatprep.subr.mxu0 0.0
  %527 = vmatpush1.msra.mxu0 0.0
  %528 = vmatprep.subr.mxu0 0.0
  %529 = vmatpush1.msra.mxu0 0.0
  %530 = vmatprep.subr.mxu0 0.0
  %531 = vmatpush1.msra.mxu0 0.0
  %532 = vmatprep.subr.mxu0 0.0
  %533 = vmatpush1.msra.mxu0 0.0
  %534 = vmatprep.subr.mxu0 0.0
  %535 = vmatpush1.msra.mxu0 0.0
  %536 = vmatprep.subr.mxu0 0.0
  %537 = vmatpush1.msra.mxu0 0.0
  %538 = vmatprep.subr.mxu0 0.0
  %539 = vmatpush1.msra.mxu0 0.0
  %540 = vmatprep.subr.mxu0 0.0
  %541 = vmatpush1.msra.mxu0 0.0
  %542 = vmatprep.subr.mxu0 0.0
  %543 = vmatpush1.msra.mxu0 0.0
  %544 = vmatprep.subr.mxu0 0.0
  %545 = vmatpush1.msra.mxu0 0.0
  %546 = vmatprep.mubr.f32.mxu0 0.0
  %547 = vmatmul.mubr.f32.gmra.mrb[0].mxu0 %v453
  %v548 = vpop.f32.mrb[0].mxu0
  %v549 = vadd.f32 %v480, %v548
  %v550 = vpop.f32.mrb[0].mxu0
  %551 = vmatprep.mubr.f32.mxu0 0.0
  %552 = vmatmul.mubr.f32.gmra.mrb[0].mxu0 %v454
  %v553 = vpop.f32.mrb[0].mxu0
  %v554 = vadd.f32 %v480, %v553
  %v555 = vpop.f32.mrb[0].mxu0
  %556 = vmatprep.mubr.f32.mxu0 0.0
  %557 = vmatmul.mubr.f32.gmra.mrb[0].mxu0 %v455
  %v558 = vpop.f32.mrb[0].mxu0
  %v559 = vadd.f32 %v480, %v558
  %v560 = vpop.f32.mrb[0].mxu0
  %561 = vmatprep.mubr.f32.mxu0 0.0
  %562 = vmatmul.mubr.f32.gmra.mrb[0].mxu0 %v456
  %v563 = vpop.f32.mrb[0].mxu0
  %v564 = vadd.f32 %v480, %v563
  %v565 = vpop.f32.mrb[0].mxu0
  %566 = vmatprep.mubr.f32.mxu0 0.0
  %567 = vmatmul.mubr.f32.gmra.mrb[0].mxu0 %v457
  %v568 = vpop.f32.mrb[0].mxu0
  %v569 = vadd.f32 %v480, %v568
  %v570 = vpop.f32.mrb[0].mxu0
  %571 = vmatprep.mubr.f32.mxu0 0.0
  %572 = vmatmul.mubr.f32.gmra.mrb[0].mxu0 %v458
  %v573 = vpop.f32.mrb[0].mxu0
  %v574 = vadd.f32 %v480, %v573
  %v575 = vpop.f32.mrb[0].mxu0
  %576 = vdwg.mxu0
  %577 = vst [vmem:[%s9] sm:$0xff] %v549
  %578 = vst [vmem:[%s9 + $0x8] sm:$0xff] %v554
  %579 = vst [vmem:[%s9 + $0x10] sm:$0xff] %v559
  %580 = vst [vmem:[%s9 + $0x18] sm:$0xff] %v564
  %581 = vst [vmem:[%s9 + $0x20] sm:$0xff] %v569
  %582 = vst [vmem:[%s9 + $0x28] sm:$0xff] %v574
  // Predicated region
  $region38: #{lightweight_ann_forward.1} parent=0 // pred_check
    _
  $region39: #{lightweight_ann_forward.1} parent=0 // pred_check_branch
    %584 = sbr.rel (0) target = $region41
  $region40: #{lightweight_ann_forward.1} parent=0 // pred_region
    _
  $region41: #{lightweight_ann_forward.1} parent=0 // pred_fallthru
    _
  // Predicated region
  $region42: #{lightweight_ann_forward.1} parent=0 // pred_check
    _
  $region43: #{lightweight_ann_forward.1} parent=0 // pred_check_branch
    %586 = sbr.rel (0) target = $region45
  $region44: #{lightweight_ann_forward.1} parent=0 // pred_region
    _
  $region45: #{lightweight_ann_forward.1} parent=0 // pred_fallthru
    _

</llo_original>
